<compile_context>
chip_gen: v7x
topology: tpu7x:2x2x1
jax: 0.10.0
libtpu: 0.0.40
codegen_flags: <defaults>
</compile_context>

<pallas_src>
import math

import jax
import jax.numpy as jnp
from jax.experimental import pallas as pl
from jax.experimental.pallas import tpu as pltpu


def mlp_kernel(x_ref, w1_ref, w2_ref, p_ref, b3_ref, o_ref):
    H1 = w1_ref.shape[1]          # 64
    H2 = w2_ref.shape[1]          # 32

    # fc1 + relu : bf16 MXU operands (x cast in vregs), f32 accumulate.
    h1 = jnp.dot(x_ref[...].astype(jnp.bfloat16), w1_ref[...],
                 preferred_element_type=jnp.float32)
    h1 = jnp.maximum(h1 + p_ref[:, 0:H1], 0.0)                    # (B, H1) f32

    # fc2 + relu : cast activation to bf16 in-kernel, f32 accumulate.
    h2 = jnp.dot(h1.astype(jnp.bfloat16), w2_ref[...],
                 preferred_element_type=jnp.float32)
    h2 = jnp.maximum(h2 + p_ref[:, H1:H1 + H2], 0.0)              # (B, H2) f32

    # fc3 (output width 1): VPU multiply + lane reduction instead of a
    # 1-column MXU pass; scalar bias comes from SMEM.
    w3_row = p_ref[:, H1 + H2:H1 + 2 * H2]                        # (1, H2) f32
    logits = jnp.sum(h2 * w3_row, axis=-1, keepdims=True) + b3_ref[0]

    # Sigmoid on the EUP; direct (B, 1) store.
    o_ref[...] = jax.nn.sigmoid(logits)


def prepare_params(w1, b1, w2, b2, w3, b3):
    """One-time parameter prep (outside the hot forward path).

    Returns bf16 weight matrices, a single lane-dense (1, 128) f32 vector
    packing [b1 | b2 | w3_row], and the fc3 scalar bias for SMEM."""
    w1_bf = w1.astype(jnp.bfloat16)                     # (D, H1)
    w2_bf = w2.astype(jnp.bfloat16)                     # (H1, H2)
    packed = jnp.concatenate(
        [b1.reshape(1, -1), b2.reshape(1, -1), w3.reshape(1, -1)],
        axis=1).astype(jnp.float32)                     # (1, H1 + 2*H2) == (1, 128)
    b3_s = b3.reshape((1,)).astype(jnp.float32)         # scalar bias -> SMEM
    return w1_bf, w2_bf, packed, b3_s


def mlp_forward(x, w1_bf, w2_bf, packed, b3_s):
    """Hot path: a single fused pallas_call. x: (B, D_in) f32."""
    B, D = x.shape
    H1 = w1_bf.shape[1]
    H2 = w2_bf.shape[1]

    vmem = pl.BlockSpec(memory_space=pltpu.MemorySpace.VMEM)
    smem = pl.BlockSpec(memory_space=pltpu.MemorySpace.SMEM)

    bytes_accessed = (x.size * 4 + w1_bf.size * 2 + w2_bf.size * 2
                      + packed.size * 4 + b3_s.size * 4 + B * 4)
    cost = pl.CostEstimate(
        flops=2 * B * (D * H1 + H1 * H2 + H2),
        transcendentals=B,
        bytes_accessed=bytes_accessed,
    )

    return pl.pallas_call(
        mlp_kernel,
        out_shape=jax.ShapeDtypeStruct((B, 1), jnp.float32),
        in_specs=[vmem,        # x (f32)
                  vmem,        # w1 (bf16)
                  vmem,        # w2 (bf16)
                  vmem,        # packed [b1 | b2 | w3_row] (1, 128) f32
                  smem],       # b3 scalar (f32)
        out_specs=vmem,
        cost_estimate=cost,
    )(x, w1_bf, w2_bf, packed, b3_s)


def init_linear(key, fan_in, fan_out):
    """nn.Linear-style init: U(-1/sqrt(fan_in), +1/sqrt(fan_in)).

    Returns W of shape (fan_in, fan_out) and b of shape (1, fan_out)."""
    kw, kb = jax.random.split(key)
    bound = 1.0 / math.sqrt(fan_in)
    w = jax.random.uniform(kw, (fan_in, fan_out), jnp.float32, -bound, bound)
    b = jax.random.uniform(kb, (1, fan_out), jnp.float32, -bound, bound)
    return w, b


if __name__ == "__main__":
    # Net(input_shape=32, shapes=[64, 32]); batch of 8 samples.
    batch, input_shape, h1, h2 = 8, 32, 64, 32

    key = jax.random.PRNGKey(0)
    kx, k1, k2, k3 = jax.random.split(key, 4)

    x = jax.random.normal(kx, (batch, input_shape), jnp.float32)
    w1, b1 = init_linear(k1, input_shape, h1)
    w2, b2 = init_linear(k2, h1, h2)
    w3, b3 = init_linear(k3, h2, 1)

    # One-time parameter preparation (bf16 weights + packed bias/w3 vector).
    w1_bf, w2_bf, packed, b3_s = prepare_params(w1, b1, w2, b2, w3, b3)
    w1_bf, w2_bf, packed, b3_s = jax.block_until_ready(
        (w1_bf, w2_bf, packed, b3_s))

    out = mlp_forward(x, w1_bf, w2_bf, packed, b3_s)
    out = jax.block_until_ready(out)

    # Pure-JAX f32 reference (same module semantics, no Pallas).
    ref = jnp.maximum(x @ w1 + b1, 0.0)
    ref = jnp.maximum(ref @ w2 + b2, 0.0)
    ref = jax.nn.sigmoid(ref @ w3 + b3)

    assert out.shape == (batch, 1)
    # bf16 matmul operands => slightly looser tolerance vs f32 reference.
    assert jnp.allclose(out, ref, atol=1e-2), "mismatch vs reference"

    print("KERNEL_OK")
</pallas_src>

<mosaic_0001>
module attributes {stable_mosaic.version = 11 : i64} {
  func.func @mlp_kernel(%arg0: memref<8x32xf32, #tpu.memory_space<vmem>>, %arg1: memref<32x64xbf16, #tpu.memory_space<vmem>>, %arg2: memref<64x32xbf16, #tpu.memory_space<vmem>>, %arg3: memref<1x128xf32, #tpu.memory_space<vmem>>, %arg4: memref<1xf32, #tpu.memory_space<smem>>, %arg5: memref<8x1xf32, #tpu.memory_space<vmem>>) attributes {dimension_semantics = [], scalar_prefetch = 0 : i64, scratch_operands = 0 : i64, tpu.core_type = #tpu.core_type<tc>} {
    %c0 = arith.constant 0 : index
    %c0_0 = arith.constant 0 : index
    %0 = vector.load %arg0[%c0, %c0_0] : memref<8x32xf32, #tpu.memory_space<vmem>>, vector<8x32xf32>
    %1 = arith.truncf %0 : vector<8x32xf32> to vector<8x32xbf16>
    %c0_1 = arith.constant 0 : index
    %c0_2 = arith.constant 0 : index
    %2 = vector.load %arg1[%c0_1, %c0_2] : memref<32x64xbf16, #tpu.memory_space<vmem>>, vector<32x64xbf16>
    %cst = arith.constant dense<0.000000e+00> : vector<8x64xf32>
    %3 = tpu.matmul %1, %2, %cst {dimension_numbers = #tpu.dot_dimension_numbers<[1], [0], [0], [1], [0, 0, 1, 1], [], []>} : vector<8x32xbf16>, vector<32x64xbf16>, vector<8x64xf32> -> vector<8x64xf32>
    %c0_3 = arith.constant 0 : index
    %c0_4 = arith.constant 0 : index
    %4 = vector.load %arg3[%c0_3, %c0_4] : memref<1x128xf32, #tpu.memory_space<vmem>>, vector<1x64xf32>
    %5 = vector.broadcast %4 : vector<1x64xf32> to vector<8x64xf32>
    %6 = arith.addf %3, %5 : vector<8x64xf32>
    %cst_5 = arith.constant 0.000000e+00 : f32
    %7 = vector.broadcast %cst_5 : f32 to vector<8x64xf32>
    %8 = arith.maximumf %6, %7 : vector<8x64xf32>
    %9 = arith.truncf %8 : vector<8x64xf32> to vector<8x64xbf16>
    %c0_6 = arith.constant 0 : index
    %c0_7 = arith.constant 0 : index
    %10 = vector.load %arg2[%c0_6, %c0_7] : memref<64x32xbf16, #tpu.memory_space<vmem>>, vector<64x32xbf16>
    %cst_8 = arith.constant dense<0.000000e+00> : vector<8x32xf32>
    %11 = tpu.matmul %9, %10, %cst_8 {dimension_numbers = #tpu.dot_dimension_numbers<[1], [0], [0], [1], [0, 0, 1, 1], [], []>} : vector<8x64xbf16>, vector<64x32xbf16>, vector<8x32xf32> -> vector<8x32xf32>
    %c0_9 = arith.constant 0 : index
    %c64 = arith.constant 64 : index
    %12 = vector.load %arg3[%c0_9, %c64] : memref<1x128xf32, #tpu.memory_space<vmem>>, vector<1x32xf32>
    %13 = vector.broadcast %12 : vector<1x32xf32> to vector<8x32xf32>
    %14 = arith.addf %11, %13 : vector<8x32xf32>
    %cst_10 = arith.constant 0.000000e+00 : f32
    %15 = vector.broadcast %cst_10 : f32 to vector<8x32xf32>
    %16 = arith.maximumf %14, %15 : vector<8x32xf32>
    %c0_11 = arith.constant 0 : index
    %c96 = arith.constant 96 : index
    %17 = vector.load %arg3[%c0_11, %c96] : memref<1x128xf32, #tpu.memory_space<vmem>>, vector<1x32xf32>
    %18 = vector.broadcast %17 : vector<1x32xf32> to vector<8x32xf32>
    %19 = arith.mulf %16, %18 : vector<8x32xf32>
    %cst_12 = arith.constant dense<0.000000e+00> : vector<8xf32>
    %20 = vector.multi_reduction <add>, %19, %cst_12 [1] : vector<8x32xf32> to vector<8xf32>
    %21 = vector.shape_cast %20 : vector<8xf32> to vector<8x1xf32>
    %c0_13 = arith.constant 0 : index
    %22 = memref.load %arg4[%c0_13] : memref<1xf32, #tpu.memory_space<smem>>
    %23 = vector.broadcast %22 : f32 to vector<8x1xf32>
    %24 = arith.addf %21, %23 : vector<8x1xf32>
    %25 = arith.negf %24 : vector<8x1xf32>
    %26 = math.exp %25 : vector<8x1xf32>
    %cst_14 = arith.constant 1.000000e+00 : f32
    %27 = vector.broadcast %cst_14 : f32 to vector<8x1xf32>
    %28 = arith.addf %27, %26 : vector<8x1xf32>
    %29 = arith.divf %27, %28 : vector<8x1xf32>
    %c0_15 = arith.constant 0 : index
    %c0_16 = arith.constant 0 : index
    %30 = vector.load %arg5[%c0_15, %c0_16] : memref<8x1xf32, #tpu.memory_space<vmem>>, vector<8x1xf32>
    tpu.vector_store %arg5[%c0_15, %c0_16], %29 {strides = array<i32>} : memref<8x1xf32, #tpu.memory_space<vmem>>, vector<8x1xf32>,
    return
  }
}

</mosaic_0001>

<llo_original>
// kernel: tpu_custom_call.1
$region0: #{tpu_custom_call.1}
  #allocation0 [shape = 'u32[]', space=smem, size = 0x4, offset = 0x4, fixed_abs, tag = 'smem constant byte address 0x4 - core index']
  #allocation1 [shape = 'u32[144,128]{1,0:T(1,128)}', space=vmem, size = 0x12000, scoped, tag = 'internal scratch']
  #allocation2 [shape = 'f32[1]{0:T(128)S(6)}', space=smem, size = 0x200, scoped, tag = 'scoped memory for tpu_custom_call.1']
  %s0 = inlined_call_operand.vmem [shape: f32[8,32], index: 0, kind: input, shape index: {}]
  %s1 = inlined_call_operand.vmem [shape: bf16[32,64], index: 1, kind: input, shape index: {}]
  %s2 = inlined_call_operand.vmem [shape: bf16[64,32], index: 2, kind: input, shape index: {}]
  %s3 = inlined_call_operand.vmem [shape: f32[1,128], index: 3, kind: input, shape index: {}]
  %s4 = inlined_call_operand.<no memory space> [shape: f32[1], index: 4, kind: input, shape index: {}]
  %s5 = inlined_call_operand.vmem [shape: f32[8,1], index: 5, kind: output, shape index: {}]
  %s6 = sld [smem:[#allocation0]]
  $region30: #{tpu_custom_call.1} parent=0
    _
  %s8 = ssub.s32 1, %s6
  %s9 = scalar_select 0, %s8, %s6
  %10 = sst [smem:[#allocation2]] %s4
  // Predicated region
  $region2: #{tpu_custom_call.1} parent=0 // pred_check
    _
  $region3: #{tpu_custom_call.1} parent=0 // pred_check_branch
    %12 = sbr.rel (0) target = $region5
  $region4: #{tpu_custom_call.1} parent=0 // pred_region
    _
  $region5: #{tpu_custom_call.1} parent=0 // pred_fallthru
    _
  // Predicated region
  $region6: #{tpu_custom_call.1} parent=0 // pred_check
    _
  $region7: #{tpu_custom_call.1} parent=0 // pred_check_branch
    %14 = sbr.rel (0) target = $region9
  $region8: #{tpu_custom_call.1} parent=0 // pred_region
    _
  $region9: #{tpu_custom_call.1} parent=0 // pred_fallthru
    _
  // Predicated region
  $region10: #{tpu_custom_call.1} parent=0 // pred_check
    _
  $region11: #{tpu_custom_call.1} parent=0 // pred_check_branch
    %16 = sbr.rel (0) target = $region13
  $region12: #{tpu_custom_call.1} parent=0 // pred_region
    _
  $region13: #{tpu_custom_call.1} parent=0 // pred_fallthru
    _
  // Predicated region
  $region14: #{tpu_custom_call.1} parent=0 // pred_check
    _
  $region15: #{tpu_custom_call.1} parent=0 // pred_check_branch
    %18 = sbr.rel (0) target = $region17
  $region16: #{tpu_custom_call.1} parent=0 // pred_region
    _
  $region17: #{tpu_custom_call.1} parent=0 // pred_fallthru
    _
  // Predicated region
  $region18: #{tpu_custom_call.1} parent=0 // pred_check
    _
  $region19: #{tpu_custom_call.1} parent=0 // pred_check_branch
    %20 = sbr.rel (0) target = $region21
  $region20: #{tpu_custom_call.1} parent=0 // pred_region
    _
  $region21: #{tpu_custom_call.1} parent=0 // pred_fallthru
    _
  %v22 = vld [vmem:[%s0] sm:$0xff]
  %v23 = vpack.c.bf16 %v22, %v22
  %v24 = vld [vmem:[%s1] sm:$0xf]
  %v25 = vld [vmem:[%s1 + $0x4] sm:$0xf]
  %v26 = vld [vmem:[%s1 + $0x8] sm:$0xf]
  %v27 = vld [vmem:[%s1 + $0xc] sm:$0xf]
  %v28 = vld [vmem:[%s3] sm:$0x1]
  %v30 = vlaneseq
  %v31 = vshrl.u32 %v30, 7
  %v32 = vsub.s32 0, %v31
  %v33 = vrot.slane %v28, %v32
  %v39 = vunpack.c.l.b16 %v24
  %v40 = vunpack.c.l.b16 %v25
  %v41 = vunpack.c.l.b16 %v26
  %v42 = vunpack.c.l.b16 %v27
  %v43 = vpack.c.b16 %v40, %v39
  %v44 = vpack.c.b16 %v42, %v41
  %vm47 = vcmask 261120
  %v49 = vsel %vm47, %v23, 0
  %51 = vmatprep.subr.bf16.mxu0 0
  %52 = vmatpush1.bf16.msra.mxu0 %v43
  %53 = vmatprep.subr.bf16.mxu0 0
  %54 = vmatpush1.bf16.msra.mxu0 %v44
  %55 = vmatprep.subr.bf16.mxu0 0
  %56 = vmatpush1.bf16.msra.mxu0 0
  %57 = vmatprep.subr.bf16.mxu0 0
  %58 = vmatpush1.bf16.msra.mxu0 0
  %59 = vmatprep.subr.bf16.mxu0 0
  %60 = vmatpush1.bf16.msra.mxu0 0
  %61 = vmatprep.subr.bf16.mxu0 0
  %62 = vmatpush1.bf16.msra.mxu0 0
  %63 = vmatprep.subr.bf16.mxu0 0
  %64 = vmatpush1.bf16.msra.mxu0 0
  %65 = vmatprep.subr.bf16.mxu0 0
  %66 = vmatpush1.bf16.msra.mxu0 0
  %67 = vmatprep.subr.bf16.mxu0 0
  %68 = vmatpush1.bf16.msra.mxu0 0
  %69 = vmatprep.subr.bf16.mxu0 0
  %70 = vmatpush1.bf16.msra.mxu0 0
  %71 = vmatprep.subr.bf16.mxu0 0
  %72 = vmatpush1.bf16.msra.mxu0 0
  %73 = vmatprep.subr.bf16.mxu0 0
  %74 = vmatpush1.bf16.msra.mxu0 0
  %75 = vmatprep.subr.bf16.mxu0 0
  %76 = vmatpush1.bf16.msra.mxu0 0
  %77 = vmatprep.subr.bf16.mxu0 0
  %78 = vmatpush1.bf16.msra.mxu0 0
  %79 = vmatprep.subr.bf16.mxu0 0
  %80 = vmatpush1.bf16.msra.mxu0 0
  %81 = vmatprep.subr.bf16.mxu0 0
  %82 = vmatpush1.bf16.msra.mxu0 0
  %83 = vmatprep.mubr.bf16.mxu0 0
  %84 = vmatmul.mubr.bf16.gmra.mrb[0].mxu0 %v49
  %v85 = vpop.f32.mrb[0].mxu0
  %v86 = vadd.f32 %v33, %v85
  %v87 = vpop.f32.mrb[0].mxu0
  %v88 = vpop.f32.mrb[0].mxu0
  %v89 = vpop.f32.mrb[0].mxu0
  %90 = vdwg.mxu0
  %v91 = vmax.f32 %v86, 0.0
  %v92 = vpack.c.bf16 %v91, %v91
  %v93 = vld [vmem:[%s2] sm:$0xf]
  %v94 = vld [vmem:[%s2 + $0x4] sm:$0xf]
  %v95 = vld [vmem:[%s2 + $0x8] sm:$0xf]
  %v96 = vld [vmem:[%s2 + $0xc] sm:$0xf]
  %v97 = vld [vmem:[%s2 + $0x10] sm:$0xf]
  %v98 = vld [vmem:[%s2 + $0x14] sm:$0xf]
  %v99 = vld [vmem:[%s2 + $0x18] sm:$0xf]
  %v100 = vld [vmem:[%s2 + $0x1c] sm:$0xf]
  %v109 = vunpack.c.l.b16 %v93
  %v110 = vunpack.c.l.b16 %v94
  %v111 = vunpack.c.l.b16 %v95
  %v112 = vunpack.c.l.b16 %v96
  %v113 = vunpack.c.l.b16 %v97
  %v114 = vunpack.c.l.b16 %v98
  %v115 = vunpack.c.l.b16 %v99
  %v116 = vunpack.c.l.b16 %v100
  %v117 = vpack.c.b16 %v110, %v109
  %v118 = vpack.c.b16 %v112, %v111
  %v119 = vpack.c.b16 %v114, %v113
  %v120 = vpack.c.b16 %v116, %v115
  %125 = vrot.lane.b32.xlu0 %v33, 64
  %v126 = vpop.permute.xlu0 %125
  %vm128 = vcmask 523264
  %v130 = vsel %vm128, %v92, 0
  %132 = vmatprep.subr.bf16.mxu0 0
  %133 = vmatpush1.bf16.msra.mxu0 %v117
  %134 = vmatprep.subr.bf16.mxu0 0
  %135 = vmatpush1.bf16.msra.mxu0 %v118
  %136 = vmatprep.subr.bf16.mxu0 0
  %137 = vmatpush1.bf16.msra.mxu0 %v119
  %138 = vmatprep.subr.bf16.mxu0 0
  %139 = vmatpush1.bf16.msra.mxu0 %v120
  %140 = vmatprep.subr.bf16.mxu0 0
  %141 = vmatpush1.bf16.msra.mxu0 0
  %142 = vmatprep.subr.bf16.mxu0 0
  %143 = vmatpush1.bf16.msra.mxu0 0
  %144 = vmatprep.subr.bf16.mxu0 0
  %145 = vmatpush1.bf16.msra.mxu0 0
  %146 = vmatprep.subr.bf16.mxu0 0
  %147 = vmatpush1.bf16.msra.mxu0 0
  %148 = vmatprep.subr.bf16.mxu0 0
  %149 = vmatpush1.bf16.msra.mxu0 0
  %150 = vmatprep.subr.bf16.mxu0 0
  %151 = vmatpush1.bf16.msra.mxu0 0
  %152 = vmatprep.subr.bf16.mxu0 0
  %153 = vmatpush1.bf16.msra.mxu0 0
  %154 = vmatprep.subr.bf16.mxu0 0
  %155 = vmatpush1.bf16.msra.mxu0 0
  %156 = vmatprep.subr.bf16.mxu0 0
  %157 = vmatpush1.bf16.msra.mxu0 0
  %158 = vmatprep.subr.bf16.mxu0 0
  %159 = vmatpush1.bf16.msra.mxu0 0
  %160 = vmatprep.subr.bf16.mxu0 0
  %161 = vmatpush1.bf16.msra.mxu0 0
  %162 = vmatprep.subr.bf16.mxu0 0
  %163 = vmatpush1.bf16.msra.mxu0 0
  %164 = vmatprep.mubr.bf16.mxu0 0
  %165 = vmatmul.mubr.bf16.gmra.mrb[0].mxu0 %v130
  %v166 = vpop.f32.mrb[0].mxu0
  %v167 = vadd.f32 %v126, %v166
  %v168 = vpop.f32.mrb[0].mxu0
  %v169 = vpop.f32.mrb[0].mxu0
  %v170 = vpop.f32.mrb[0].mxu0
  %171 = vdwg.mxu0
  %v172 = vmax.f32 %v167, 0.0
  %173 = vrot.lane.b32.xlu0 %v33, 32
  %v174 = vpop.permute.xlu0 %173
  %v176 = vmul.f32 %v172, %v174
  %v177 = vsel %vm47, %v176, 0.0
  %178 = vadd.xlane.f32.xlu0 %v177
  %v179 = vpop.xlane.xlu0 %178
  %s180 = sld [smem:[#allocation2]]
  %v181 = vstv %s180
  %v182 = vadd.f32 %v179, %v181
  %v183 = vxor.u32 %v182, 2147483648
  %v184 = vmul.f32 %v183, 1.442695
  %v185 = vpow.pop %v184
  %v186 = vadd.f32 %v185, 1.0
  %v187 = vrcp.pop %v186
  %v188 = vmul.f32 1.0, %v187
  %vm189 = vcmask 7168
  %190 = vst.msk [vmem:[%s5] sm:$0xff] %vm189, %v188
  // Predicated region
  $region22: #{tpu_custom_call.1} parent=0 // pred_check
    _
  $region23: #{tpu_custom_call.1} parent=0 // pred_check_branch
    %192 = sbr.rel (0) target = $region25
  $region24: #{tpu_custom_call.1} parent=0 // pred_region
    _
  $region25: #{tpu_custom_call.1} parent=0 // pred_fallthru
    _
  // Predicated region
  $region26: #{tpu_custom_call.1} parent=0 // pred_check
    _
  $region27: #{tpu_custom_call.1} parent=0 // pred_check_branch
    %194 = sbr.rel (0) target = $region29
  $region28: #{tpu_custom_call.1} parent=0 // pred_region
    _
  $region29: #{tpu_custom_call.1} parent=0 // pred_fallthru
    _

</llo_original>
